<compile_context>
chip_gen: v5e
topology: v5e:2x2
jax: 0.10.0
libtpu: 0.0.40
codegen_flags: <defaults>
</compile_context>

<pallas_src>
import functools

import jax
import jax.numpy as jnp
from jax.experimental import pallas as pl
from jax.experimental.pallas import tpu as pltpu

COEF = 0.97  # matches PreEmphasis(coef=0.97); flipped_filter = [[-coef, 1.0]]
_LANE = 128


def _preemphasis_kernel(x_ref, halo_ref, o_ref, *, coef):
    j = pl.program_id(1)          # T-tile index
    x = x_ref[...]                # (bb, bt) block in VMEM
    halo = halo_ref[...]          # (bb, hl) block: the 128 lanes just before this tile

    # Sample feeding column 0 of this tile:
    #   first T tile  -> reflect padding: x[:, 1]
    #   later T tiles -> last sample of the previous T tile = last lane of halo.
    # (For j == 0 the halo block is a clamped dummy read; it is masked out here.)
    prev0 = jnp.where(j == 0, x[:, 1:2], halo[:, -1:])           # (bb, 1)

    # prev[:, t] = x[:, t-1]; lane 0 wraps around and is fixed with a VPU select
    # *before* the single full store (no trailing partial store).
    prev = pltpu.roll(x, shift=1, axis=1)                        # XLU lane rotate
    lane0 = jax.lax.broadcasted_iota(jnp.int32, x.shape, 1) == 0
    prev = jnp.where(lane0, prev0, prev)

    o_ref[...] = (x - coef * prev).astype(o_ref.dtype)           # one full-tile store


def pre_emphasis(x: jax.Array, coef: float = COEF, *,
                 block_b: int | None = None, block_t: int | None = None,
                 out_dtype=None) -> jax.Array:
    """Pallas TPU equivalent of PreEmphasis.forward. x: (B, T) -> (B, T)."""
    B, T = x.shape
    assert T >= 2, "reflect padding needs at least 2 samples"
    itemsize = x.dtype.itemsize
    out_dtype = out_dtype or x.dtype  # optional bf16 output halves write traffic

    tile_cap = 4 * 1024 * 1024  # bytes per (bb, bt) block

    # Lane (T) tile: fixed lane-aligned size; ragged tails handled by cdiv + masking.
    if block_t is not None:
        bt = block_t
    elif T <= _LANE:
        bt = T
    else:
        bt = min(4096, pl.cdiv(T, _LANE) * _LANE)
    if bt < T:
        assert bt % _LANE == 0, "block_t must be a multiple of 128 when tiling T"

    # Sublane (B) tile: multiple of 8; keep >=2 blocks on the parallel B axis
    # whenever B allows it (v7x megacore), and respect the per-tile VMEM cap.
    if block_b is not None:
        bb = block_b
    else:
        bb = B if B < 8 else min((B // 8) * 8, 256)
        if B >= 16:
            bb = min(bb, max(8, (B // 2) // 8 * 8))
        while bb > 8 and bb * bt * itemsize > tile_cap:
            bb = max(8, (bb // 2 + 7) // 8 * 8)

    hl = min(_LANE, bt)            # halo block width (full dim if T <= 128)
    r = max(bt // hl, 1)           # halo blocks per main T tile

    grid = (pl.cdiv(B, bb), pl.cdiv(T, bt))

    kernel = functools.partial(_preemphasis_kernel, coef=coef)
    return pl.pallas_call(
        kernel,
        out_shape=jax.ShapeDtypeStruct((B, T), out_dtype),
        grid=grid,
        in_specs=[
            # Main tile.
            pl.BlockSpec((bb, bt), lambda i, j: (i, j)),
            # Halo: the hl-lane block ending right before this tile; clamped to
            # block 0 for j == 0 (unused there -- reflect branch takes over).
            pl.BlockSpec((bb, hl), lambda i, j: (i, jnp.maximum(j * r - 1, 0))),
        ],
        out_specs=pl.BlockSpec((bb, bt), lambda i, j: (i, j)),
        compiler_params=pltpu.CompilerParams(
            # No cross-iteration state: both axes are megacore-shardable.
            dimension_semantics=("parallel", "parallel"),
            vmem_limit_bytes=32 * 1024 * 1024),
        cost_estimate=pl.CostEstimate(
            flops=2 * B * T, transcendentals=0,
            bytes_accessed=2 * B * T * itemsize),
    )(x, x)


def _reference(x: jnp.ndarray, coef: float = COEF) -> jnp.ndarray:
    # Pure-JAX reference mirroring the PyTorch code (reflect pad + conv1d).
    prev = jnp.concatenate([x[:, 1:2], x[:, :-1]], axis=1)
    return x - coef * prev


if __name__ == "__main__":
    key = jax.random.PRNGKey(0)
    k1, k2, k3 = jax.random.split(key, 3)

    # Small single-tile case.
    x = jax.random.normal(k1, (4, 256), dtype=jnp.float32)
    out = jax.block_until_ready(pre_emphasis(x))
    assert out.shape == x.shape and out.dtype == jnp.float32
    assert jnp.allclose(out, _reference(x), atol=1e-6, rtol=1e-6)

    # Multi-T-tile case exercising the 128-lane halo (grid = (1, 4)).
    x2 = jax.random.normal(k2, (8, 1024), dtype=jnp.float32)
    out2 = jax.block_until_ready(pre_emphasis(x2, block_b=8, block_t=256))
    assert jnp.allclose(out2, _reference(x2), atol=1e-6, rtol=1e-6)

    # Ragged B and T (cdiv grid, masked tails) with tiles on both axes.
    x3 = jax.random.normal(k3, (12, 1000), dtype=jnp.float32)
    out3 = jax.block_until_ready(pre_emphasis(x3, block_b=8, block_t=256))
    assert jnp.allclose(out3, _reference(x3), atol=1e-6, rtol=1e-6)

    print("KERNEL_OK")
</pallas_src>

<mosaic_0001>
module attributes {stable_mosaic.version = 11 : i64} {
  func.func @_preemphasis_kernel(%arg0: i32, %arg1: i32, %arg2: memref<4x256xf32, #tpu.memory_space<vmem>>, %arg3: memref<4x128xf32, #tpu.memory_space<vmem>>, %arg4: memref<4x256xf32, #tpu.memory_space<vmem>>) attributes {dimension_semantics = [#tpu.dimension_semantics<parallel>, #tpu.dimension_semantics<parallel>], iteration_bounds = array<i64: 1, 1>, scalar_prefetch = 0 : i64, scratch_operands = 0 : i64, tpu.core_type = #tpu.core_type<tc>, window_params = [{transform_indices = @transform_0, window_bounds = array<i64: 4, 256>}, {transform_indices = @transform_1, window_bounds = array<i64: 4, 128>}, {transform_indices = @transform_2, window_bounds = array<i64: 4, 256>}]} {
    %c0 = arith.constant 0 : index
    %c0_0 = arith.constant 0 : index
    %0 = vector.load %arg2[%c0, %c0_0] : memref<4x256xf32, #tpu.memory_space<vmem>>, vector<4x256xf32>
    %c0_1 = arith.constant 0 : index
    %c0_2 = arith.constant 0 : index
    %1 = vector.load %arg3[%c0_1, %c0_2] : memref<4x128xf32, #tpu.memory_space<vmem>>, vector<4x128xf32>
    %c0_i32 = arith.constant 0 : i32
    %2 = arith.cmpi eq, %arg1, %c0_i32 : i32
    %3 = vector.extract_strided_slice %0 {offsets = [0, 1], sizes = [4, 1], strides = [1, 1]} : vector<4x256xf32> to vector<4x1xf32>
    %4 = vector.extract_strided_slice %1 {offsets = [0, 127], sizes = [4, 1], strides = [1, 1]} : vector<4x128xf32> to vector<4x1xf32>
    %5 = arith.select %2, %3, %4 : vector<4x1xf32>
    %c1_i32 = arith.constant 1 : i32
    %6 = tpu.dynamic_rotate %0 by %c1_i32 dim 1 : vector<4x256xf32>, i32 -> vector<4x256xf32>
    %7 = tpu.iota {dimensions = array<i32: 1>} : vector<4x256xi32>
    %c0_i32_3 = arith.constant 0 : i32
    %8 = vector.broadcast %c0_i32_3 : i32 to vector<4x256xi32>
    %9 = arith.cmpi eq, %7, %8 : vector<4x256xi32>
    %10 = vector.shape_cast %5 : vector<4x1xf32> to vector<4x1xf32>
    %11 = vector.broadcast %10 : vector<4x1xf32> to vector<4x256xf32>
    %12 = arith.select %9, %11, %6 : vector<4x256xi1>, vector<4x256xf32>
    %cst = arith.constant 9.700000e-01 : f32
    %13 = vector.broadcast %cst : f32 to vector<4x256xf32>
    %14 = arith.mulf %13, %12 : vector<4x256xf32>
    %15 = arith.subf %0, %14 : vector<4x256xf32>
    %c0_4 = arith.constant 0 : index
    %c0_5 = arith.constant 0 : index
    %16 = vector.load %arg4[%c0_4, %c0_5] : memref<4x256xf32, #tpu.memory_space<vmem>>, vector<4x256xf32>
    tpu.vector_store %arg4[%c0_4, %c0_5], %15 {strides = array<i32>} : memref<4x256xf32, #tpu.memory_space<vmem>>, vector<4x256xf32>,
    return
  }
  func.func @transform_0(%arg0: i32, %arg1: i32) -> (i32, i32) {
    %c0_i32 = arith.constant 0 : i32
    return %arg0, %arg1 : i32, i32
  }
  func.func @transform_1(%arg0: i32, %arg1: i32) -> (i32, i32) {
    %c2_i32 = arith.constant 2 : i32
    %0 = arith.muli %arg1, %c2_i32 : i32
    %c1_i32 = arith.constant 1 : i32
    %1 = arith.subi %0, %c1_i32 : i32
    %c0_i32 = arith.constant 0 : i32
    %2 = arith.maxsi %1, %c0_i32 : i32
    %c0_i32_0 = arith.constant 0 : i32
    return %arg0, %2 : i32, i32
  }
  func.func @transform_2(%arg0: i32, %arg1: i32) -> (i32, i32) {
    %c0_i32 = arith.constant 0 : i32
    return %arg0, %arg1 : i32, i32
  }
}

</mosaic_0001>

<llo_original>
// kernel: tpu_custom_call.1
$region0: #{tpu_custom_call.1}
  #allocation0 [shape = 'u32[]', space=smem, size = 0x4, offset = 0x4, fixed_abs, tag = 'smem constant byte address 0x4 - core index']
  #allocation1 [shape = 'u32[72,128]{1,0:T(1,128)}', space=vmem, size = 0x9000, scoped, tag = 'internal scratch']
  %s0 = inlined_call_operand.hbm [shape: f32[4,256], index: 0, kind: input, shape index: {}]
  %s1 = inlined_call_operand.hbm [shape: f32[4,256], index: 1, kind: input, shape index: {}]
  %s2 = inlined_call_operand.hbm [shape: f32[4,256], index: 2, kind: output, shape index: {}]
  %s3 = sld [smem:[#allocation0]]
  $region26: #{tpu_custom_call.1} parent=0
    _
  %s5 = ssub.s32 1, %s3
  %s6 = scalar_select 0, %s5, %s3
  $region1: #{tpu_custom_call.1} parent=0
    #allocation2 [shape = 'u8[4096]{0}', space=vmem, size = 0x1000, scoped, tag = 'input window, operand 0, single buffered']
    #allocation3 [shape = 's32[1]{0}', space=sflag, size = 0x4, scoped, tag = 'scoped memory for tpu_custom_call.1']
    #allocation4 [shape = 's32[1]{0}', space=sflag, size = 0x4, scoped, tag = 'scoped memory for tpu_custom_call.1']
    #allocation5 [shape = 'u8[2048]{0}', space=vmem, size = 0x800, scoped, tag = 'input window, operand 1, single buffered']
    #allocation6 [shape = 's32[1]{0}', space=sflag, size = 0x4, scoped, tag = 'scoped memory for tpu_custom_call.1']
    #allocation7 [shape = 'u8[4096]{0}', space=vmem, size = 0x1000, scoped, tag = 'output window, operand 0, single buffered']
    %7 = vsyncpa [#allocation3], 0
    %8 = vsyncpa [#allocation6], 0
    %9 = vsyncpa [#allocation4], 0
    // Predicated region
    $region2: #{tpu_custom_call.1} parent=1 // pred_check
      _
    $region3: #{tpu_custom_call.1} parent=1 // pred_check_branch
      %11 = sbr.rel (0) target = $region5
    $region4: #{tpu_custom_call.1} parent=1 // pred_region
      %13 = vsyncadd [#allocation3], 0
      %s15 = sshll.u32 %s0, 4
      %s16 = int_to_ptr.hbm [resolvable:$true] %s15
      %s17 = sshll.u32 [#allocation2], 4
      %s18 = int_to_ptr.vmem [resolvable:$true] %s17
      %20 = dma.hbm_to_vmem [thread:$0]  %s16, 128, %s18, [#allocation3]
    $region5: #{tpu_custom_call.1} parent=1 // pred_fallthru
      _
    // Predicated region
    $region6: #{tpu_custom_call.1} parent=1 // pred_check
      _
    $region7: #{tpu_custom_call.1} parent=1 // pred_check_branch
      %22 = sbr.rel (0) target = $region9
    $region8: #{tpu_custom_call.1} parent=1 // pred_region
      %s23 = smul.u32 0, 2
      %s24 = ssub.s32 %s23, 1
      %p25 = scmp.gt.s32.totalorder %s24, 0
      %s26 = scalar_select %p25, %s24, 0
      %28 = vsyncadd [#allocation6], 0
      %s29 = smul.addr %s26, 4
      %s30 = scalar_lea.hbm %s1, %s29
      %s32 = sshll.u32 %s30, 4
      %s33 = int_to_ptr.hbm [resolvable:$true] %s32
      %s34 = sshll.u32 [#allocation5], 4
      %s35 = int_to_ptr.vmem [resolvable:$true] %s34
      %37 = dma.hbm_to_vmem [thread:$0]  %s33, 64, %s35, [#allocation6]
    $region9: #{tpu_custom_call.1} parent=1 // pred_fallthru
      _
    // Predicated region
    $region10: #{tpu_custom_call.1} parent=1 // pred_check
      _
    $region11: #{tpu_custom_call.1} parent=1 // pred_check_branch
      %39 = sbr.rel (0) target = $region13
    $region12: #{tpu_custom_call.1} parent=1 // pred_region
      %41 = dma.done [#allocation3], 128
    $region13: #{tpu_custom_call.1} parent=1 // pred_fallthru
      _
    // Predicated region
    $region14: #{tpu_custom_call.1} parent=1 // pred_check
      _
    $region15: #{tpu_custom_call.1} parent=1 // pred_check_branch
      %43 = sbr.rel (0) target = $region17
    $region16: #{tpu_custom_call.1} parent=1 // pred_region
      %45 = dma.done [#allocation6], 64
    $region17: #{tpu_custom_call.1} parent=1 // pred_fallthru
      _
    %s46 = smul.u32 0, 2
    %s47 = ssub.s32 %s46, 1
    %p48 = scmp.gt.s32.totalorder %s47, 0
    %s49 = scalar_select %p48, %s47, 0
    %v50 = vld [vmem:[#allocation2] sm:$0xff]
    %v51 = vld [vmem:[#allocation5] sm:$0xf]
    %p52 = scmp.eq.s32.totalorder 0, 0
    %s53 = scalar_select %p52, 1, 0
    %v54 = vstv %s53
    %vm55 = vcmp.eq.s32.totalorder %v54, 1
    %57 = vrot.lane.b32.xlu0 %v51, 2
    %v58 = vpop.permute.xlu0 %57
    %v60 = vsel %vm55, %v50, %v58
    %62 = vst [vmem:[#allocation1] ss:$2 sm:$0xff] %v50
    %v63 = vld.sshfl [vmem:[#allocation1] sm:$0xff pattern:$0x75316420]
    %v64 = vld.sshfl [vmem:[#allocation1 + $0x8] sm:$0xff pattern:$0x75316420]
    %67 = vrot.lane.b32.xlu0 %v63, 1
    %v68 = vpop.permute.xlu0 %67
    %69 = vrot.lane.b32.xlu0 %v64, 1
    %v70 = vpop.permute.xlu0 %69
    %v71 = vlaneseq
    %v72 = vand.u32 %v71, 127
    %vm73 = vcmp.lt.s32.totalorder %v72, 1
    %v74 = vsel %vm73, %v68, %v70
    %v75 = vsel %vm73, %v70, %v68
    %v76 = vadd.s32 %v72, 128
    %vm77 = vcmp.eq.s32.totalorder %v72, 0
    %vm78 = vcmp.eq.s32.totalorder %v76, 0
    %80 = vset.pattern.permute.xlu0 1
    %81 = vperm.xlu0 %80, %v60
    %v82 = vpop.permute.xlu0 %81
    %v85 = vunpack.c.l.s4 839922192
    %v86 = vunpack.c.0.s8 %v85
    %v87 = vperm.slane %v82, %v86
    %89 = vst [vmem:[#allocation1] ss:$2 sm:$0xff] %v87
    %v90 = vld.sshfl [vmem:[#allocation1] sm:$0xff pattern:$0x75316420]
    %v91 = vld.sshfl [vmem:[#allocation1 + $0x8] sm:$0xff pattern:$0x75316420]
    %v94 = vsel %vm77, %v90, %v75
    %v95 = vsel %vm78, %v91, %v74
    %v96 = vmul.f32 %v94, 0.97
    %v97 = vmul.f32 %v95, 0.97
    %v100 = vrot.slane %v97, 4
    %vm101 = vcmask 1043456
    %v102 = vsel %vm101, %v96, %v100
    %v104 = vsub.f32 %v50, %v102
    %105 = vst [vmem:[#allocation7] sm:$0xff] %v104
    // Predicated region
    $region18: #{tpu_custom_call.1} parent=1 // pred_check
      _
    $region19: #{tpu_custom_call.1} parent=1 // pred_check_branch
      %107 = sbr.rel (0) target = $region21
    $region20: #{tpu_custom_call.1} parent=1 // pred_region
      %109 = vsyncadd [#allocation4], 0
      %s111 = sshll.u32 [#allocation7], 4
      %s112 = int_to_ptr.vmem [resolvable:$true] %s111
      %s113 = sshll.u32 %s2, 4
      %s114 = int_to_ptr.hbm [resolvable:$true] %s113
      %116 = dma.vmem_to_hbm [thread:$0]  %s112, 128, %s114, [#allocation4]
    $region21: #{tpu_custom_call.1} parent=1 // pred_fallthru
      _
    // Predicated region
    $region22: #{tpu_custom_call.1} parent=1 // pred_check
      _
    $region23: #{tpu_custom_call.1} parent=1 // pred_check_branch
      %118 = sbr.rel (0) target = $region25
    $region24: #{tpu_custom_call.1} parent=1 // pred_region
      %120 = dma.done [#allocation4], 128
    $region25: #{tpu_custom_call.1} parent=1 // pred_fallthru
      _
    %121 = vsyncpa [#allocation3], 1
    %122 = vsyncpa [#allocation6], 1
    %123 = vsyncpa [#allocation4], 1

</llo_original>
